<compile_context>
chip_gen: v7x
topology: tpu7x:2x2x1
jax: 0.10.0
libtpu: 0.0.40
codegen_flags: <defaults>
</compile_context>

<pallas_src>
import functools

import jax
import jax.numpy as jnp
from jax.experimental import pallas as pl
from jax.experimental.pallas import tpu as pltpu

EPS = 1e-5      # nn.GroupNorm default
_LANE = 128


def _round_up(x, m):
    return (x + m - 1) // m * m


# ----------------------------------------------------------------------------
# Path A: whole-sample slab, single pass, fn fused into the epilogue.
# ----------------------------------------------------------------------------
def _gn1_fused_kernel(x_ref, gamma_ref, beta_ref, o_ref, *, n_valid, hw_valid,
                      fn):
    x = x_ref[...].astype(jnp.float32)                 # (1, C, HWp)
    hw_pad = x.shape[2]
    if hw_valid == hw_pad:                             # lane-aligned, no mask
        xs = x
    else:
        lane = jax.lax.broadcasted_iota(jnp.int32, x.shape, 2)
        xs = jnp.where(lane < hw_valid, x, 0.0)
    # One-pass moments (biased variance, matching PyTorch GroupNorm).
    s1 = jnp.sum(xs)
    s2 = jnp.sum(xs * xs)
    mean = s1 / n_valid
    var = s2 / n_valid - mean * mean
    inv_std = jax.lax.rsqrt(jnp.maximum(var, 0.0) + EPS)

    g = gamma_ref[...]                                 # (1, C, 1)
    b = beta_ref[...]                                  # (1, C, 1)
    y = (x - mean) * inv_std * g + b
    if fn is not None:                                 # fused elementwise fn
        y = fn(y)
    o_ref[...] = y.astype(o_ref.dtype)


def _vmem_budget(c, hw_block, io_itemsize):
    c_sub_io = _round_up(c, max(8, 32 // io_itemsize))
    io = 2 * 2 * c_sub_io * hw_block * io_itemsize     # double-buffered in+out
    params = 2 * 2 * _round_up(c, 8) * _LANE * 4       # gamma + beta buffers
    temps = 2 * _round_up(c, 8) * hw_block * 4         # f32 compute temporaries
    return min(io + params + temps + (2 << 20), 64 << 20)


def _gn1_fused(x3, gamma3, beta3, fn, hw_valid):
    N, C, HWp = x3.shape
    kernel = functools.partial(_gn1_fused_kernel, n_valid=float(C * hw_valid),
                               hw_valid=hw_valid, fn=fn)
    vmem = _vmem_budget(C, HWp, jnp.dtype(x3.dtype).itemsize)
    return pl.pallas_call(
        kernel,
        out_shape=jax.ShapeDtypeStruct((N, C, HWp), x3.dtype),
        grid_spec=pltpu.PrefetchScalarGridSpec(
            num_scalar_prefetch=0,
            grid=(N,),
            in_specs=[
                pl.BlockSpec((1, C, HWp), lambda i: (i, 0, 0)),
                pl.BlockSpec((1, C, 1), lambda i: (0, 0, 0)),
                pl.BlockSpec((1, C, 1), lambda i: (0, 0, 0)),
            ],
            out_specs=pl.BlockSpec((1, C, HWp), lambda i: (i, 0, 0)),
        ),
        compiler_params=pltpu.CompilerParams(
            dimension_semantics=("parallel",),
            vmem_limit_bytes=int(vmem),
        ),
    )(x3, gamma3, beta3)


# ----------------------------------------------------------------------------
# Path B: HW-tiled two-pass design (fits v7x's 64 MiB VMEM for big slabs).
# ----------------------------------------------------------------------------
def _gn1_stats_kernel(x_ref, mean_ref, rstd_ref, s1_ref, s2_ref, *,
                      n_valid, hw_valid, tile_hw, needs_mask):
    j = pl.program_id(1)

    @pl.when(j == 0)
    def _():
        s1_ref[...] = jnp.zeros_like(s1_ref)
        s2_ref[...] = jnp.zeros_like(s2_ref)

    x = x_ref[...].astype(jnp.float32)                 # (1, C, T)
    if needs_mask:
        start = j * tile_hw
        lane = jax.lax.broadcasted_iota(jnp.int32, x.shape, 2) + start
        x = jnp.where(lane < hw_valid, x, 0.0)
    s1_ref[...] = s1_ref[...] + jnp.sum(x)
    s2_ref[...] = s2_ref[...] + jnp.sum(x * x)

    @pl.when(j == pl.num_programs(1) - 1)
    def _():
        mean = s1_ref[...] / n_valid                   # (1, 1)
        var = s2_ref[...] / n_valid - mean * mean
        rstd = jax.lax.rsqrt(jnp.maximum(var, 0.0) + EPS)
        mean_ref[...] = mean.reshape(1, 1, 1)
        rstd_ref[...] = rstd.reshape(1, 1, 1)


def _gn1_apply_kernel(x_ref, mean_ref, rstd_ref, gamma_ref, beta_ref, o_ref, *,
                      fn):
    x = x_ref[...].astype(jnp.float32)                 # (1, C, T)
    y = (x - mean_ref[...]) * rstd_ref[...] * gamma_ref[...] + beta_ref[...]
    if fn is not None:
        y = fn(y)
    o_ref[...] = y.astype(o_ref.dtype)


def _gn1_tiled(x3, gamma3, beta3, fn, hw_valid, tile_hw):
    N, C, HWp = x3.shape
    n_tiles = HWp // tile_hw
    needs_mask = hw_valid != HWp
    itemsize = jnp.dtype(x3.dtype).itemsize
    vmem = _vmem_budget(C, tile_hw, itemsize)

    stats_kernel = functools.partial(
        _gn1_stats_kernel, n_valid=float(C * hw_valid), hw_valid=hw_valid,
        tile_hw=tile_hw, needs_mask=needs_mask)
    mean, rstd = pl.pallas_call(
        stats_kernel,
        out_shape=(jax.ShapeDtypeStruct((N, 1, 1), jnp.float32),
                   jax.ShapeDtypeStruct((N, 1, 1), jnp.float32)),
        grid_spec=pltpu.PrefetchScalarGridSpec(
            num_scalar_prefetch=0,
            grid=(N, n_tiles),
            in_specs=[pl.BlockSpec((1, C, tile_hw), lambda i, j: (i, 0, j))],
            out_specs=[pl.BlockSpec((1, 1, 1), lambda i, j: (i, 0, 0)),
                       pl.BlockSpec((1, 1, 1), lambda i, j: (i, 0, 0))],
            scratch_shapes=[pltpu.VMEM((1, 1), jnp.float32),
                            pltpu.VMEM((1, 1), jnp.float32)],
        ),
        compiler_params=pltpu.CompilerParams(
            dimension_semantics=("parallel", "arbitrary"),
            vmem_limit_bytes=int(vmem),
        ),
    )(x3)

    apply_kernel = functools.partial(_gn1_apply_kernel, fn=fn)
    out3 = pl.pallas_call(
        apply_kernel,
        out_shape=jax.ShapeDtypeStruct((N, C, HWp), x3.dtype),
        grid_spec=pltpu.PrefetchScalarGridSpec(
            num_scalar_prefetch=0,
            grid=(N, n_tiles),
            in_specs=[
                pl.BlockSpec((1, C, tile_hw), lambda i, j: (i, 0, j)),
                pl.BlockSpec((1, 1, 1), lambda i, j: (i, 0, 0)),
                pl.BlockSpec((1, 1, 1), lambda i, j: (i, 0, 0)),
                pl.BlockSpec((1, C, 1), lambda i, j: (0, 0, 0)),
                pl.BlockSpec((1, C, 1), lambda i, j: (0, 0, 0)),
            ],
            out_specs=pl.BlockSpec((1, C, tile_hw), lambda i, j: (i, 0, j)),
        ),
        compiler_params=pltpu.CompilerParams(
            dimension_semantics=("parallel", "parallel"),
            vmem_limit_bytes=int(vmem),
        ),
    )(x3, mean, rstd, gamma3, beta3)
    return out3


# ----------------------------------------------------------------------------
# Public entry point.
# ----------------------------------------------------------------------------
def groupnorm1_pallas(x_nchw, gamma, beta, fn=None, *,
                      slab_limit_bytes=6 << 20, tile_hw_target=2048,
                      force_tiled=False):
    """GroupNorm(1, C) over NCHW input, optionally fused with elementwise fn."""
    N, C, H, W = x_nchw.shape
    HW = H * W

    # Choose path: whole-sample slab if the f32 compute slab is small enough
    # (keeps double-buffered in+out well within v7x's 64 MiB VMEM), otherwise
    # an HW-tiled two-pass design.
    slab_f32 = _round_up(C, 8) * _round_up(HW, _LANE) * 4
    use_tiled = force_tiled or (slab_f32 > slab_limit_bytes)

    if use_tiled:
        tile_hw = min(_round_up(HW, _LANE), _round_up(tile_hw_target, _LANE))
        HWp = _round_up(HW, tile_hw)            # lane-dense, tile-aligned
    else:
        tile_hw = None
        HWp = _round_up(HW, _LANE)              # lane-dense

    x3 = x_nchw.reshape(N, C, HW)
    if HWp != HW:
        x3 = jnp.pad(x3, ((0, 0), (0, 0), (0, HWp - HW)))
    g3 = gamma.reshape(1, C, 1).astype(jnp.float32)
    b3 = beta.reshape(1, C, 1).astype(jnp.float32)

    if use_tiled:
        out3 = _gn1_tiled(x3, g3, b3, fn, HW, tile_hw)
    else:
        out3 = _gn1_fused(x3, g3, b3, fn, HW)

    if HWp != HW:
        out3 = out3[:, :, :HW]
    return out3.reshape(N, C, H, W)


class PreNorm:
    """JAX/Pallas port of the PyTorch PreNorm module.

    norm = GroupNorm(1, dim) as a Pallas kernel. `fn` is any JAX callable;
    if `fuse_fn=True` (fn must be elementwise), it is fused into the kernel
    epilogue, otherwise it is applied to the normalized output afterwards.
    """

    def __init__(self, dim, fn, *, fuse_fn=False):
        self.dim = dim
        self.fn = fn
        self.fuse_fn = fuse_fn
        # PyTorch default init: weight=1, bias=0.
        self.gamma = jnp.ones((dim,), dtype=jnp.float32)
        self.beta = jnp.zeros((dim,), dtype=jnp.float32)

    def __call__(self, x):
        if self.fuse_fn:
            return groupnorm1_pallas(x, self.gamma, self.beta, fn=self.fn)
        xn = groupnorm1_pallas(x, self.gamma, self.beta)
        return self.fn(xn)


if __name__ == "__main__":
    key = jax.random.PRNGKey(0)
    silu = lambda t: t * jax.nn.sigmoid(t)   # stand-in for the wrapped fn

    def ref_prenorm(x, gamma, beta, fn):
        N, C, H, W = x.shape
        xf = x.astype(jnp.float32).reshape(N, -1)
        mean = xf.mean(axis=1, keepdims=True)
        var = ((xf - mean) ** 2).mean(axis=1, keepdims=True)
        xn = ((xf - mean) * jax.lax.rsqrt(var + EPS)).reshape(N, C, H, W)
        xn = xn * gamma[None, :, None, None] + beta[None, :, None, None]
        return fn(xn).astype(x.dtype)

    k1, k2, k3 = jax.random.split(key, 3)
    ok = True

    # Case 1: lane-aligned HW (16*16=256), fused-fn whole-slab path.
    x1 = jax.random.normal(k1, (2, 4, 16, 16), dtype=jnp.float32)
    m1 = PreNorm(4, silu, fuse_fn=True)
    out1 = jax.block_until_ready(m1(x1))
    ok &= bool(jnp.allclose(out1, ref_prenorm(x1, m1.gamma, m1.beta, silu),
                            atol=1e-5, rtol=1e-5))

    # Case 2: non-128-multiple HW (14*14=196) -> padding + masked stats.
    x2 = jax.random.normal(k2, (2, 8, 14, 14), dtype=jnp.float32)
    m2 = PreNorm(8, silu, fuse_fn=True)
    out2 = jax.block_until_ready(m2(x2))
    ok &= bool(jnp.allclose(out2, ref_prenorm(x2, m2.gamma, m2.beta, silu),
                            atol=1e-5, rtol=1e-5))

    # Case 3: force the HW-tiled two-pass path (what large v7x slabs use),
    # with padding in the last tile (HW=16*14=224 -> 2 tiles of 128).
    x3 = jax.random.normal(k3, (2, 4, 16, 14), dtype=jnp.float32)
    m3 = PreNorm(4, silu, fuse_fn=True)
    out3 = jax.block_until_ready(
        groupnorm1_pallas(x3, m3.gamma, m3.beta, fn=silu,
                          force_tiled=True, tile_hw_target=128))
    ok &= bool(jnp.allclose(out3, ref_prenorm(x3, m3.gamma, m3.beta, silu),
                            atol=1e-5, rtol=1e-5))

    assert ok, "mismatch vs reference"
    print("KERNEL_OK")
</pallas_src>

<mosaic_0001>
module attributes {stable_mosaic.version = 11 : i64} {
  func.func @_gn1_fused_kernel(%arg0: i32, %arg1: memref<1x4x256xf32, #tpu.memory_space<vmem>>, %arg2: memref<1x4x1xf32, #tpu.memory_space<vmem>>, %arg3: memref<1x4x1xf32, #tpu.memory_space<vmem>>, %arg4: memref<1x4x256xf32, #tpu.memory_space<vmem>>) attributes {dimension_semantics = [#tpu.dimension_semantics<parallel>], iteration_bounds = array<i64: 2>, scalar_prefetch = 0 : i64, scratch_operands = 0 : i64, tpu.core_type = #tpu.core_type<tc>, window_params = [{transform_indices = @transform_0, window_bounds = array<i64: 1, 4, 256>}, {pipeline_mode = #tpu.pipeline_mode<synchronous>, transform_indices = @transform_1, window_bounds = array<i64: 1, 4, 1>}, {pipeline_mode = #tpu.pipeline_mode<synchronous>, transform_indices = @transform_2, window_bounds = array<i64: 1, 4, 1>}, {transform_indices = @transform_3, window_bounds = array<i64: 1, 4, 256>}]} {
    %c0 = arith.constant 0 : index
    %c0_0 = arith.constant 0 : index
    %c0_1 = arith.constant 0 : index
    %0 = vector.load %arg1[%c0, %c0_0, %c0_1] : memref<1x4x256xf32, #tpu.memory_space<vmem>>, vector<1x4x256xf32>
    %1 = vector.shape_cast %0 : vector<1x4x256xf32> to vector<1x1x4x256xf32>
    %cst = arith.constant dense<0.000000e+00> : vector<1xf32>
    %2 = vector.multi_reduction <add>, %1, %cst [1, 2, 3] : vector<1x1x4x256xf32> to vector<1xf32>
    %3 = vector.shape_cast %2 : vector<1xf32> to vector<1x1x1x1xf32>
    %4 = vector.extract %3[0, 0, 0, 0] : f32 from vector<1x1x1x1xf32>
    %5 = arith.mulf %0, %0 : vector<1x4x256xf32>
    %6 = vector.shape_cast %5 : vector<1x4x256xf32> to vector<1x1x4x256xf32>
    %cst_2 = arith.constant dense<0.000000e+00> : vector<1xf32>
    %7 = vector.multi_reduction <add>, %6, %cst_2 [1, 2, 3] : vector<1x1x4x256xf32> to vector<1xf32>
    %8 = vector.shape_cast %7 : vector<1xf32> to vector<1x1x1x1xf32>
    %9 = vector.extract %8[0, 0, 0, 0] : f32 from vector<1x1x1x1xf32>
    %cst_3 = arith.constant 1.024000e+03 : f32
    %10 = arith.divf %4, %cst_3 : f32
    %cst_4 = arith.constant 1.024000e+03 : f32
    %11 = arith.divf %9, %cst_4 : f32
    %12 = arith.mulf %10, %10 : f32
    %13 = arith.subf %11, %12 : f32
    %cst_5 = arith.constant 0.000000e+00 : f32
    %14 = arith.maximumf %13, %cst_5 : f32
    %cst_6 = arith.constant 9.99999974E-6 : f32
    %15 = arith.addf %14, %cst_6 : f32
    %16 = math.rsqrt %15 : f32
    %c0_7 = arith.constant 0 : index
    %c0_8 = arith.constant 0 : index
    %c0_9 = arith.constant 0 : index
    %17 = vector.load %arg2[%c0_7, %c0_8, %c0_9] : memref<1x4x1xf32, #tpu.memory_space<vmem>>, vector<1x4x1xf32>
    %c0_10 = arith.constant 0 : index
    %c0_11 = arith.constant 0 : index
    %c0_12 = arith.constant 0 : index
    %18 = vector.load %arg3[%c0_10, %c0_11, %c0_12] : memref<1x4x1xf32, #tpu.memory_space<vmem>>, vector<1x4x1xf32>
    %19 = vector.broadcast %10 : f32 to vector<1x4x256xf32>
    %20 = arith.subf %0, %19 : vector<1x4x256xf32>
    %21 = vector.broadcast %16 : f32 to vector<1x4x256xf32>
    %22 = arith.mulf %20, %21 : vector<1x4x256xf32>
    %23 = vector.broadcast %17 : vector<1x4x1xf32> to vector<1x4x256xf32>
    %24 = arith.mulf %22, %23 : vector<1x4x256xf32>
    %25 = vector.broadcast %18 : vector<1x4x1xf32> to vector<1x4x256xf32>
    %26 = arith.addf %24, %25 : vector<1x4x256xf32>
    %27 = arith.negf %26 : vector<1x4x256xf32>
    %28 = math.exp %27 : vector<1x4x256xf32>
    %cst_13 = arith.constant 1.000000e+00 : f32
    %29 = vector.broadcast %cst_13 : f32 to vector<1x4x256xf32>
    %30 = arith.addf %29, %28 : vector<1x4x256xf32>
    %31 = arith.divf %29, %30 : vector<1x4x256xf32>
    %32 = arith.mulf %26, %31 : vector<1x4x256xf32>
    %c0_14 = arith.constant 0 : index
    %c0_15 = arith.constant 0 : index
    %c0_16 = arith.constant 0 : index
    %33 = vector.load %arg4[%c0_14, %c0_15, %c0_16] : memref<1x4x256xf32, #tpu.memory_space<vmem>>, vector<1x4x256xf32>
    tpu.vector_store %arg4[%c0_14, %c0_15, %c0_16], %32 {strides = array<i32>} : memref<1x4x256xf32, #tpu.memory_space<vmem>>, vector<1x4x256xf32>,
    return
  }
  func.func @transform_0(%arg0: i32) -> (i32, i32, i32) {
    %c0_i32 = arith.constant 0 : i32
    %c0_i32_0 = arith.constant 0 : i32
    %c0_i32_1 = arith.constant 0 : i32
    return %arg0, %c0_i32, %c0_i32_0 : i32, i32, i32
  }
  func.func @transform_1(%arg0: i32) -> (i32, i32, i32) {
    %c0_i32 = arith.constant 0 : i32
    %c0_i32_0 = arith.constant 0 : i32
    %c0_i32_1 = arith.constant 0 : i32
    %c0_i32_2 = arith.constant 0 : i32
    return %c0_i32, %c0_i32_0, %c0_i32_1 : i32, i32, i32
  }
  func.func @transform_2(%arg0: i32) -> (i32, i32, i32) {
    %c0_i32 = arith.constant 0 : i32
    %c0_i32_0 = arith.constant 0 : i32
    %c0_i32_1 = arith.constant 0 : i32
    %c0_i32_2 = arith.constant 0 : i32
    return %c0_i32, %c0_i32_0, %c0_i32_1 : i32, i32, i32
  }
  func.func @transform_3(%arg0: i32) -> (i32, i32, i32) {
    %c0_i32 = arith.constant 0 : i32
    %c0_i32_0 = arith.constant 0 : i32
    %c0_i32_1 = arith.constant 0 : i32
    return %arg0, %c0_i32, %c0_i32_0 : i32, i32, i32
  }
}

</mosaic_0001>

<llo_original>
// kernel: tpu_custom_call.1
$region0: #{tpu_custom_call.1}
  #allocation0 [shape = 'u32[]', space=smem, size = 0x4, offset = 0x4, fixed_abs, tag = 'smem constant byte address 0x4 - core index']
  #allocation1 [shape = 'u32[144,128]{1,0:T(1,128)}', space=vmem, size = 0x12000, scoped, tag = 'internal scratch']
  %s0 = inlined_call_operand.hbm [shape: f32[2,4,256], index: 0, kind: input, shape index: {}]
  %s1 = inlined_call_operand.vmem [shape: f32[1,4,1], index: 1, kind: input, shape index: {}]
  %s2 = inlined_call_operand.vmem [shape: f32[1,4,1], index: 2, kind: input, shape index: {}]
  %s3 = inlined_call_operand.hbm [shape: f32[2,4,256], index: 3, kind: output, shape index: {}]
  %s4 = sld [smem:[#allocation0]]
  $region49: #{tpu_custom_call.1} parent=0
    _
  %s6 = ssub.s32 1, %s4
  %s7 = scalar_select 0, %s6, %s4
  $region1: #{tpu_custom_call.1} parent=0
    #allocation2 [shape = 'u8[8192]{0}', space=vmem, size = 0x2000, scoped, tag = 'input window, operand 0']
    #allocation3 [shape = 's32[2]{0}', space=sflag, size = 0x8, scoped, tag = 'scoped memory for tpu_custom_call.1']
    #allocation4 [shape = 's32[2]{0}', space=sflag, size = 0x8, scoped, tag = 'scoped memory for tpu_custom_call.1']
    #allocation5 [shape = 'u8[8192]{0}', space=vmem, size = 0x2000, scoped, tag = 'output window, operand 0']
    %8 = vsyncpa [#allocation3], 0
    %s9 = scalar_lea.sflag [#allocation3], 1
    %10 = vsyncpa %s9, 0
    %11 = vsyncpa [#allocation4], 0
    %s12 = scalar_lea.sflag [#allocation4], 1
    %13 = vsyncpa %s12, 0
    loop: start=0, step=1, limit=4
    $region2: #{tpu_custom_call.1} parent=1 // loop_pre_header
      _
    $region3: #{tpu_custom_call.1} parent=1 // loop_header
      %s15 = sphi 0, %s19
      %p16 = scmp.ge.s32.totalorder %s15, 4
      %s25 = sphi 0, %s27
      %s28 = sphi 0, %s25
      %s29 = sphi 0, %s28
      %s45 = sphi 0, %s29
      %s49 = sphi 0, %s49
      %s51 = sphi 0, %s49
      %s52 = sphi 0, %s51
      %s66 = sphi 0, %s52
      %s70 = sphi 0, %s70
      %s72 = sphi 0, %s70
      %s73 = sphi 0, %s72
      %s87 = sphi 0, %s73
      %s93 = sphi 0, %s95
      %s96 = sphi 0, %s93
      %s97 = sphi 0, %s96
      %s113 = sphi 0, %s97
    $region4: #{tpu_custom_call.1} parent=1 // loop_header_branch
      %18 = sbr.rel (%p16) target = $region8
    $region5: #{tpu_custom_call.1} parent=1 // loop_body
      %s20 = ssub.s32 %s15, 1
      %s21 = ssub.s32 %s15, 2
      %s22 = sadd.s32 %s15, 1
      %s23 = ssub.s32 %s15, %s22
      %p24 = scmp.eq.s32.totalorder %s23, 0
      %s26 = sadd.s32 %s25, 1
      %s27 = scalar_select %p24, %s25, %s26
      %p30 = pneg %p24
      %p31 = scmp.eq.s32.totalorder %s15, 1
      %p32 = por %p30, %p31
      %p33 = scmp.ne.s32.totalorder %s25, %s28
      %p34 = scmp.eq.s32.totalorder %s15, 0
      %p35 = por %p33, %p34
      %p36 = scmp.ne.s32.totalorder %s25, %s28
      %p37 = scmp.eq.s32.totalorder %s20, 1
      %p38 = por %p36, %p37
      %p39 = scmp.ne.s32.totalorder %s28, %s29
      %p40 = scmp.eq.s32.totalorder %s20, 0
      %p41 = por %p39, %p40
      %p42 = scmp.ne.s32.totalorder %s28, %s29
      %p43 = scmp.eq.s32.totalorder %s21, 1
      %p44 = por %p42, %p43
      %p46 = scmp.ne.s32.totalorder %s29, %s45
      %p47 = scmp.eq.s32.totalorder %s21, 0
      %p48 = por %p46, %p47
      %s50 = sadd.s32 %s49, 1
      %p53 = scmp.eq.s32.totalorder %s15, 1
      %p54 = scmp.ne.s32.totalorder %s49, %s51
      %p55 = scmp.eq.s32.totalorder %s15, 0
      %p56 = por %p54, %p55
      %p57 = scmp.ne.s32.totalorder %s49, %s51
      %p58 = scmp.eq.s32.totalorder %s20, 1
      %p59 = por %p57, %p58
      %p60 = scmp.ne.s32.totalorder %s51, %s52
      %p61 = scmp.eq.s32.totalorder %s20, 0
      %p62 = por %p60, %p61
      %p63 = scmp.ne.s32.totalorder %s51, %s52
      %p64 = scmp.eq.s32.totalorder %s21, 1
      %p65 = por %p63, %p64
      %p67 = scmp.ne.s32.totalorder %s52, %s66
      %p68 = scmp.eq.s32.totalorder %s21, 0
      %p69 = por %p67, %p68
      %s71 = sadd.s32 %s70, 1
      %p74 = scmp.eq.s32.totalorder %s15, 1
      %p75 = scmp.ne.s32.totalorder %s70, %s72
      %p76 = scmp.eq.s32.totalorder %s15, 0
      %p77 = por %p75, %p76
      %p78 = scmp.ne.s32.totalorder %s70, %s72
      %p79 = scmp.eq.s32.totalorder %s20, 1
      %p80 = por %p78, %p79
      %p81 = scmp.ne.s32.totalorder %s72, %s73
      %p82 = scmp.eq.s32.totalorder %s20, 0
      %p83 = por %p81, %p82
      %p84 = scmp.ne.s32.totalorder %s72, %s73
      %p85 = scmp.eq.s32.totalorder %s21, 1
      %p86 = por %p84, %p85
      %p88 = scmp.ne.s32.totalorder %s73, %s87
      %p89 = scmp.eq.s32.totalorder %s21, 0
      %p90 = por %p88, %p89
      %s91 = ssub.s32 %s15, %s22
      %p92 = scmp.eq.s32.totalorder %s91, 0
      %s94 = sadd.s32 %s93, 1
      %s95 = scalar_select %p92, %s93, %s94
      %p98 = pneg %p92
      %p99 = scmp.eq.s32.totalorder %s15, 1
      %p100 = por %p98, %p99
      %p101 = scmp.ne.s32.totalorder %s93, %s96
      %p102 = scmp.eq.s32.totalorder %s15, 0
      %p103 = por %p101, %p102
      %p104 = scmp.ne.s32.totalorder %s93, %s96
      %p105 = scmp.eq.s32.totalorder %s20, 1
      %p106 = por %p104, %p105
      %p107 = scmp.ne.s32.totalorder %s96, %s97
      %p108 = scmp.eq.s32.totalorder %s20, 0
      %p109 = por %p107, %p108
      %p110 = scmp.ne.s32.totalorder %s96, %s97
      %p111 = scmp.eq.s32.totalorder %s21, 1
      %p112 = por %p110, %p111
      %p114 = scmp.ne.s32.totalorder %s97, %s113
      %p115 = scmp.eq.s32.totalorder %s21, 0
      %p116 = por %p114, %p115
      %p117 = scmp.le.s32.totalorder 1, %s15
      %p118 = scmp.lt.s32.totalorder %s15, 3
      %p119 = pnand %p117, %p118
      %p120 = pneg %p119
      // Predicated region
      $region9: #{tpu_custom_call.1} parent=5 // pred_check
        _
      $region10: #{tpu_custom_call.1} parent=5 // pred_check_branch
        %122 = sbr.rel (%p119) target = $region12
      $region11: #{tpu_custom_call.1} parent=5 // pred_region
        %s123 = ssub.s32 %s15, 1
        // Predicated region
        $region13: #{tpu_custom_call.1} parent=11 // pred_check
          %p124 = pneg %p62
        $region14: #{tpu_custom_call.1} parent=11 // pred_check_branch
          %126 = sbr.rel (%p124) target = $region16
        $region15: #{tpu_custom_call.1} parent=11 // pred_region
          _
        $region16: #{tpu_custom_call.1} parent=11 // pred_fallthru
          _
        // Predicated region
        $region17: #{tpu_custom_call.1} parent=11 // pred_check
          %p127 = pneg %p83
        $region18: #{tpu_custom_call.1} parent=11 // pred_check_branch
          %129 = sbr.rel (%p127) target = $region20
        $region19: #{tpu_custom_call.1} parent=11 // pred_region
          _
        $region20: #{tpu_custom_call.1} parent=11 // pred_fallthru
          _
      $region12: #{tpu_custom_call.1} parent=5 // pred_fallthru
        _
      %p130 = scmp.lt.s32.totalorder %s15, 2
      // Predicated region
      $region21: #{tpu_custom_call.1} parent=5 // pred_check
        %p131 = pneg %p130
      $region22: #{tpu_custom_call.1} parent=5 // pred_check_branch
        %133 = sbr.rel (%p131) target = $region24
      $region23: #{tpu_custom_call.1} parent=5 // pred_region
        // Predicated region
        $region25: #{tpu_custom_call.1} parent=23 // pred_check
          %p134 = pneg %p35
        $region26: #{tpu_custom_call.1} parent=23 // pred_check_branch
          %136 = sbr.rel (%p134) target = $region28
        $region27: #{tpu_custom_call.1} parent=23 // pred_region
          %s137 = sand.u32 %s25, 1
          %s138 = scalar_lea.sflag [#allocation3], %s137
          %s139 = sand.u32 %s25, 1
          %s140 = smul.addr %s139, 8
          %s141 = scalar_lea.vmem [#allocation2], %s140
          %s143 = ssub.s32 128, 128
          %144 = vsyncadd %s138, %s143
          %s145 = smul.addr %s15, 2
          %s146 = smul.addr %s145, 64
          %s147 = scalar_lea.hbm %s0, %s146
          %s149 = sshll.u32 %s141, 4
          %s150 = int_to_ptr.vmem [resolvable:$true] %s149
          %152 = dma.hbm_to_vmem [thread:$0]  %s147, 128, %s150, %s138
        $region28: #{tpu_custom_call.1} parent=23 // pred_fallthru
          _
      $region24: #{tpu_custom_call.1} parent=5 // pred_fallthru
        _
      %p153 = scmp.le.s32.totalorder 1, %s15
      %p154 = scmp.lt.s32.totalorder %s15, 3
      %p155 = pnand %p153, %p154
      %p156 = pneg %p155
      // Predicated region
      $region29: #{tpu_custom_call.1} parent=5 // pred_check
        _
      $region30: #{tpu_custom_call.1} parent=5 // pred_check_branch
        %158 = sbr.rel (%p155) target = $region32
      $region31: #{tpu_custom_call.1} parent=5 // pred_region
        %s159 = ssub.s32 %s15, 1
        %s160 = sand.u32 %s28, 1
        %s161 = scalar_lea.sflag [#allocation3], %s160
        %s162 = sand.u32 %s28, 1
        %s163 = smul.addr %s162, 8
        %s164 = scalar_lea.vmem [#allocation2], %s163
        // Predicated region
        $region33: #{tpu_custom_call.1} parent=31 // pred_check
          %p165 = pneg %p41
        $region34: #{tpu_custom_call.1} parent=31 // pred_check_branch
          %167 = sbr.rel (%p165) target = $region36
        $region35: #{tpu_custom_call.1} parent=31 // pred_region
          %168 = dma.done %s161, 128
        $region36: #{tpu_custom_call.1} parent=31 // pred_fallthru
          _
        %s169 = sand.u32 %s28, 1
        %s170 = scalar_lea.sflag [#allocation3], %s169
        %s171 = sand.u32 %s28, 1
        %s172 = smul.addr %s171, 8
        %s173 = scalar_lea.vmem [#allocation2], %s172
        %p174 = pneg %p41
        %p175 = pneg %p38
        %p176 = pneg %p62
        %p177 = pneg %p59
        %p178 = pneg %p83
        %p179 = pneg %p80
        %p180 = pneg %p109
        %p181 = pneg %p106
        %s182 = sand.u32 %s96, 1
        %s183 = scalar_lea.sflag [#allocation4], %s182
        %s184 = sand.u32 %s96, 1
        %s185 = smul.addr %s184, 8
        %s186 = scalar_lea.vmem [#allocation5], %s185
        %v187 = vld [vmem:[%s164] sm:$0xff]
        %v189 = vcombine.high %v187, %v187
        %vm191 = vcmask 1043456
        %v192 = vsel %vm191, %v187, 0.0
        %v193 = vsel %vm191, %v189, 0.0
        %v194 = vadd.f32 %v192, %v193
        %195 = vadd.xlane.f32.xlu0 %v194
        %v196 = vpop.xlane.xlu0 %195
        %v197 = vrot.slane %v196, 4
        %v198 = vadd.f32 %v196, %v197
        %v199 = vrot.slane %v198, 2
        %v200 = vadd.f32 %v198, %v199
        %v201 = vrot.slane %v200, 1
        %v202 = vadd.f32 %v200, %v201
        %s203 = vtos %v202
        %v204 = vmul.f32 %v187, %v187
        %v206 = vcombine.high %v204, %v204
        %v208 = vsel %vm191, %v204, 0.0
        %v209 = vsel %vm191, %v206, 0.0
        %v210 = vadd.f32 %v208, %v209
        %211 = vadd.xlane.f32.xlu0 %v210
        %v212 = vpop.xlane.xlu0 %211
        %v213 = vrot.slane %v212, 4
        %v214 = vadd.f32 %v212, %v213
        %v215 = vrot.slane %v214, 2
        %v216 = vadd.f32 %v214, %v215
        %v217 = vrot.slane %v216, 1
        %v218 = vadd.f32 %v216, %v217
        %s219 = vtos %v218
        %v220 = vrcp.pop 1024.0
        %s221 = vtos %v220
        %s222 = smul.f32 %s203, %s221
        %v223 = vrcp.pop 1024.0
        %s224 = vtos %v223
        %s225 = smul.f32 %s219, %s224
        %s226 = smul.f32 %s222, %s222
        %s227 = ssub.f32 %s225, %s226
        %s228 = smax.f32 %s227, 0.0
        %s229 = sadd.f32 %s228, 1e-05
        %v230 = vstv %s229
        %v231 = vrsqrt.pop %v230
        %s232 = vtos %v231
        %v233 = vld [vmem:[%s1] sm:$0xf]
        %v234 = vld [vmem:[%s2] sm:$0xf]
        %v235 = vstv %s222
        %v236 = vsub.f32 %v187, %v235
        %v237 = vstv %s232
        %v238 = vmul.f32 %v236, %v237
        %240 = vset.pattern.permute.xlu0 0
        %241 = vperm.xlu0 %240, %v233
        %v242 = vpop.permute.xlu0 %241
        %v244 = vunpack.c.l.s4 839922192
        %v245 = vunpack.c.0.s8 %v244
        %v246 = vlaneseq
        %v247 = vshrl.u32 %v246, 7
        %v248 = vsub.s32 %v245, %v247
        %v249 = vrot.slane %v242, %v248
        %v251 = vmul.f32 %v238, %v249
        %253 = vset.pattern.permute.xlu0 0
        %254 = vperm.xlu0 %253, %v234
        %v255 = vpop.permute.xlu0 %254
        %v257 = vunpack.c.l.s4 839922192
        %v258 = vunpack.c.0.s8 %v257
        %v259 = vlaneseq
        %v260 = vshrl.u32 %v259, 7
        %v261 = vsub.s32 %v258, %v260
        %v262 = vrot.slane %v255, %v261
        %v264 = vadd.f32 %v251, %v262
        %v265 = vxor.u32 %v264, 2147483648
        %v266 = vmul.f32 %v265, 1.442695
        %v267 = vpow.pop %v266
        %v268 = vadd.f32 %v267, 1.0
        %v269 = vrcp.pop %v268
        %v270 = vmul.f32 1.0, %v269
        %v271 = vmul.f32 %v264, %v270
        %272 = vst [vmem:[%s186] sm:$0xff] %v271
        %s273 = sand.u32 %s96, 1
        %s274 = scalar_lea.sflag [#allocation4], %s273
        %s275 = sand.u32 %s96, 1
        %s276 = smul.addr %s275, 8
        %s277 = scalar_lea.vmem [#allocation5], %s276
        // Predicated region
        $region37: #{tpu_custom_call.1} parent=31 // pred_check
          %p278 = pneg %p106
        $region38: #{tpu_custom_call.1} parent=31 // pred_check_branch
          %280 = sbr.rel (%p278) target = $region40
        $region39: #{tpu_custom_call.1} parent=31 // pred_region
          %s282 = ssub.s32 128, 128
          %283 = vsyncadd %s274, %s282
          %s284 = smul.addr %s20, 2
          %s285 = smul.addr %s284, 64
          %s286 = scalar_lea.hbm %s3, %s285
          %s288 = sshll.u32 %s277, 4
          %s289 = int_to_ptr.vmem [resolvable:$true] %s288
          %291 = dma.vmem_to_hbm [thread:$0]  %s289, 128, %s286, %s274
        $region40: #{tpu_custom_call.1} parent=31 // pred_fallthru
          _
      $region32: #{tpu_custom_call.1} parent=5 // pred_fallthru
        _
      %p292 = scmp.le.s32.totalorder 2, %s15
      // Predicated region
      $region41: #{tpu_custom_call.1} parent=5 // pred_check
        %p293 = pneg %p292
      $region42: #{tpu_custom_call.1} parent=5 // pred_check_branch
        %295 = sbr.rel (%p293) target = $region44
      $region43: #{tpu_custom_call.1} parent=5 // pred_region
        %s296 = ssub.s32 %s15, 2
        // Predicated region
        $region45: #{tpu_custom_call.1} parent=43 // pred_check
          %p297 = pneg %p112
        $region46: #{tpu_custom_call.1} parent=43 // pred_check_branch
          %299 = sbr.rel (%p297) target = $region48
        $region47: #{tpu_custom_call.1} parent=43 // pred_region
          %s300 = sand.u32 %s97, 1
          %s301 = scalar_lea.sflag [#allocation4], %s300
          %s302 = sand.u32 %s97, 1
          %s303 = smul.addr %s302, 8
          %s304 = scalar_lea.vmem [#allocation5], %s303
          %305 = dma.done %s301, 128
        $region48: #{tpu_custom_call.1} parent=43 // pred_fallthru
          _
      $region44: #{tpu_custom_call.1} parent=5 // pred_fallthru
        _
    $region6: #{tpu_custom_call.1} parent=1 // loop_footer
      %s19 = sadd.s32 1, %s15
    $region7: #{tpu_custom_call.1} parent=1 // loop_footer_branch
      %14 = sbr.rel target = $region3
    $region8: #{tpu_custom_call.1} parent=1 // loop_exit
      _
    %306 = vsyncpa [#allocation3], 1
    %s307 = scalar_lea.sflag [#allocation3], 1
    %308 = vsyncpa %s307, 1
    %309 = vsyncpa [#allocation4], 1
    %s310 = scalar_lea.sflag [#allocation4], 1
    %311 = vsyncpa %s310, 1

</llo_original>
